<compile_context>
chip_gen: v5e
topology: v5e:2x2
jax: 0.10.0
libtpu: 0.0.40
codegen_flags: <defaults>
</compile_context>

<pallas_src>
import functools

import jax
import jax.numpy as jnp
from jax.experimental import pallas as pl
from jax.experimental.pallas import tpu as pltpu


def _normalize_kernel(mean_ref, std_ref, x_ref, o_ref, *, tr, multi_row_blocks,
                      compute_dtype):
    # mean_ref / std_ref: VMEM (rows, 1) per-row columns (whole array, fetched once)
    # x_ref / o_ref:      VMEM (TR, TL) tiles of the flattened image
    if multi_row_blocks:
        # Only taken when TR is a multiple of 8, so start/size are sublane-aligned.
        start = pl.multiple_of(pl.program_id(0) * tr, tr)
        m = mean_ref[pl.ds(start, tr), :]
        s = std_ref[pl.ds(start, tr), :]
    else:
        m = mean_ref[...]
        s = std_ref[...]
    x = x_ref[...].astype(compute_dtype)
    o_ref[...] = ((x - m) / s).astype(o_ref.dtype)


def _divisors(n: int):
    out = []
    i = 1
    while i * i <= n:
        if n % i == 0:
            out.append(i)
            if i != n // i:
                out.append(n // i)
        i += 1
    return sorted(out)


def _round_up(x: int, m: int) -> int:
    return ((x + m - 1) // m) * m


def _chip_config():
    """Generation-specific block-size / VMEM budgets."""
    kind = ""
    try:
        kind = jax.devices()[0].device_kind.lower()
    except Exception:
        pass
    if "v7" in kind:
        # v7x: 64 MiB physical VMEM per TC, 3.2 TB/s HBM, 2 TensorCores.
        # Bigger blocks amortize per-step overhead (2-3x costlier at 3.2 TB/s),
        # but keep 4*block well under the scoped limit and cap at 48 MiB.
        return dict(target_block=5 << 20, vmem_budget=32 << 20, vmem_cap=48 << 20,
                    bf16_compute=True, min_steps=8)
    if "v6" in kind:
        # v6e: 128 MiB physical VMEM, ~1.4 TB/s HBM.
        return dict(target_block=6 << 20, vmem_budget=48 << 20, vmem_cap=96 << 20,
                    bf16_compute=True, min_steps=4)
    # v5e / unknown: 16 MiB default scoped VMEM, no bf16 VALU -> conservative.
    return dict(target_block=2 << 20, vmem_budget=16 << 20, vmem_cap=64 << 20,
                bf16_compute=False, min_steps=4)


def _choose_tiles(rows: int, cols: int, itemsize: int, *, target_bytes: int,
                  vmem_budget: int, min_steps: int):
    """Pick (TR, TL) obeying the (8, 128) rule, fitting VMEM, and keeping the
    grid large enough for pipeline overlap / megacore sharding."""
    # Lane dim: multiple of 128, or the full dim if it isn't 128-divisible.
    if cols % 128 == 0:
        col_opts = [d for d in _divisors(cols) if d % 128 == 0]
    else:
        col_opts = [cols]

    # Sublane dim: dtype-aware packing multiple (8 f32 / 16 bf16 / 32 int8),
    # falling back to 8 (legality floor) or the full dim.
    sub = {4: 8, 2: 16, 1: 32}.get(itemsize, 8)
    if rows % sub == 0:
        row_opts = [d for d in _divisors(rows) if d % sub == 0]
    elif rows % 8 == 0:
        row_opts = [d for d in _divisors(rows) if d % 8 == 0]
    else:
        row_opts = [rows]

    cands = []
    for tr in row_opts:
        for tl in col_opts:
            blk = tr * tl * itemsize
            steps = (rows // tr) * (cols // tl)
            cands.append((tr, tl, blk, steps))

    # Hard VMEM-fit guard: double-buffered input + output = 4 blocks (+ margin).
    fit = [c for c in cands if 4 * c[2] + (1 << 20) <= vmem_budget]
    if not fit:
        # Pathological shape (e.g. huge non-128-divisible width with tiny N*C):
        # take the smallest legal block; caller bumps vmem_limit_bytes for it.
        # TODO(synk): split cols into a 128-multiple body + tail instead.
        best = min(cands, key=lambda c: c[2])
        return best[0], best[1]

    within_target = [c for c in fit if c[2] <= target_bytes] or fit
    enough_steps = [c for c in within_target if c[3] >= min_steps]
    if enough_steps:
        # Biggest block that still leaves >= min_steps grid steps; prefer the
        # widest lane dim (longest contiguous DMAs / unmasked full-width vst).
        best = max(enough_steps, key=lambda c: (c[2], c[1]))
    else:
        # Can't reach min_steps: maximize step count (pipeline overlap, second
        # TensorCore on v7x), then block size.
        best = max(within_target, key=lambda c: (c[3], c[2], c[1]))
    return best[0], best[1]


def normalize(image: jax.Array, mean: jax.Array, std: jax.Array) -> jax.Array:
    """image: (N, C, H, W); mean/std: (C,) or (1, C, 1, 1). Returns (image - mean) / std."""
    N, C, H, W = image.shape
    rows, cols = N * C, H * W

    cfg = _chip_config()

    in_dtype = image.dtype
    # Integer images would be truncated by an integer output; promote to f32.
    out_dtype = in_dtype if jnp.issubdtype(in_dtype, jnp.floating) else jnp.float32
    # bf16 compute only where the VPU is natively bf16 (v6e/v7x); f32 elsewhere.
    compute_dtype = (jnp.bfloat16 if (in_dtype == jnp.bfloat16 and cfg["bf16_compute"])
                     else jnp.float32)

    # Flatten to a lane-dense 2-D view (contiguous reshape -> free).
    x2 = image.reshape(rows, cols)

    # Per-row (n, c) -> per-channel mean/std columns, shape (rows, 1).
    mean_c = jnp.asarray(mean, jnp.float32).reshape(-1)
    std_c = jnp.asarray(std, jnp.float32).reshape(-1)
    assert mean_c.shape[0] == C and std_c.shape[0] == C
    mean_rows = jnp.tile(mean_c, (N,)).reshape(rows, 1).astype(compute_dtype)
    std_rows = jnp.tile(std_c, (N,)).reshape(rows, 1).astype(compute_dtype)

    itemsize = jnp.dtype(in_dtype).itemsize
    out_itemsize = jnp.dtype(out_dtype).itemsize
    TR, TL = _choose_tiles(rows, cols, itemsize,
                           target_bytes=cfg["target_block"],
                           vmem_budget=cfg["vmem_budget"],
                           min_steps=cfg["min_steps"])
    grid = (rows // TR, cols // TL)

    # Scoped-VMEM ceiling: double-buffered in + out blocks, the resident
    # per-row columns (lane-padded to 128), and slack. Bump above the chip
    # default only if a pathological shape forced a big block; cap per chip.
    block_bytes = TR * TL * max(itemsize, out_itemsize)
    col_bytes = 2 * 2 * _round_up(rows, 8) * 128 * jnp.dtype(compute_dtype).itemsize
    needed = 4 * block_bytes + col_bytes + (2 << 20)
    vmem_limit = int(min(max(cfg["vmem_budget"], needed), cfg["vmem_cap"]))

    kernel = functools.partial(
        _normalize_kernel, tr=TR, multi_row_blocks=(grid[0] > 1),
        compute_dtype=compute_dtype)

    # Advisory cost: pure streaming, ~2 ops/element, read + write of the image.
    cost = pl.CostEstimate(
        flops=2 * rows * cols,
        transcendentals=0,
        bytes_accessed=rows * cols * (itemsize + out_itemsize) + 2 * rows * 4,
    )

    out2 = pl.pallas_call(
        kernel,
        out_shape=jax.ShapeDtypeStruct((rows, cols), out_dtype),
        grid_spec=pl.GridSpec(
            grid=grid,
            in_specs=[
                # Whole-array per-row columns (tiny): constant block index ->
                # fetched once, no per-block descriptor DMAs.
                pl.BlockSpec((rows, 1), lambda r, c: (0, 0)),   # mean per row
                pl.BlockSpec((rows, 1), lambda r, c: (0, 0)),   # std per row
                pl.BlockSpec((TR, TL), lambda r, c: (r, c)),    # image tile
            ],
            out_specs=pl.BlockSpec((TR, TL), lambda r, c: (r, c)),
        ),
        compiler_params=pltpu.CompilerParams(
            dimension_semantics=("parallel", "parallel"),
            vmem_limit_bytes=vmem_limit,
        ),
        cost_estimate=cost,
    )(mean_rows, std_rows, x2)

    return out2.reshape(N, C, H, W)


if __name__ == "__main__":
    # Standard ImageNet normalization constants (as in the example module).
    mean = jnp.array([0.485, 0.456, 0.406], dtype=jnp.float32)
    std = jnp.array([0.229, 0.224, 0.225], dtype=jnp.float32)

    key = jax.random.PRNGKey(0)

    # Small NCHW input consistent with the module (N=2, C=3).
    x = jax.random.uniform(key, (2, 3, 16, 16), dtype=jnp.float32)
    out = jax.block_until_ready(normalize(x, mean, std))
    ref = (x - mean.reshape(1, -1, 1, 1)) / std.reshape(1, -1, 1, 1)
    assert jnp.allclose(out, ref, rtol=1e-6, atol=1e-6), "mismatch vs reference (small)"

    # Slightly wider input to exercise the multi-step lane grid / pipeline path.
    x2 = jax.random.uniform(jax.random.PRNGKey(0), (2, 3, 32, 128), dtype=jnp.float32)
    out2 = jax.block_until_ready(normalize(x2, mean, std))
    ref2 = (x2 - mean.reshape(1, -1, 1, 1)) / std.reshape(1, -1, 1, 1)
    assert jnp.allclose(out2, ref2, rtol=1e-6, atol=1e-6), "mismatch vs reference (wide)"

    print("KERNEL_OK")
</pallas_src>

<mosaic_0001>
module attributes {stable_mosaic.version = 11 : i64} {
  func.func @_normalize_kernel(%arg0: i32, %arg1: i32, %arg2: memref<6x1xf32, #tpu.memory_space<vmem>>, %arg3: memref<6x1xf32, #tpu.memory_space<vmem>>, %arg4: memref<6x128xf32, #tpu.memory_space<vmem>>, %arg5: memref<6x128xf32, #tpu.memory_space<vmem>>) attributes {dimension_semantics = [#tpu.dimension_semantics<parallel>, #tpu.dimension_semantics<parallel>], iteration_bounds = array<i64: 1, 2>, scalar_prefetch = 0 : i64, scratch_operands = 0 : i64, tpu.core_type = #tpu.core_type<tc>, window_params = [{pipeline_mode = #tpu.pipeline_mode<synchronous>, transform_indices = @transform_0, window_bounds = array<i64: 6, 1>}, {pipeline_mode = #tpu.pipeline_mode<synchronous>, transform_indices = @transform_1, window_bounds = array<i64: 6, 1>}, {transform_indices = @transform_2, window_bounds = array<i64: 6, 128>}, {transform_indices = @transform_3, window_bounds = array<i64: 6, 128>}]} {
    %c0 = arith.constant 0 : index
    %c0_0 = arith.constant 0 : index
    %0 = vector.load %arg2[%c0, %c0_0] : memref<6x1xf32, #tpu.memory_space<vmem>>, vector<6x1xf32>
    %c0_1 = arith.constant 0 : index
    %c0_2 = arith.constant 0 : index
    %1 = vector.load %arg3[%c0_1, %c0_2] : memref<6x1xf32, #tpu.memory_space<vmem>>, vector<6x1xf32>
    %c0_3 = arith.constant 0 : index
    %c0_4 = arith.constant 0 : index
    %2 = vector.load %arg4[%c0_3, %c0_4] : memref<6x128xf32, #tpu.memory_space<vmem>>, vector<6x128xf32>
    %3 = vector.broadcast %0 : vector<6x1xf32> to vector<6x128xf32>
    %4 = arith.subf %2, %3 : vector<6x128xf32>
    %5 = vector.broadcast %1 : vector<6x1xf32> to vector<6x128xf32>
    %6 = arith.divf %4, %5 : vector<6x128xf32>
    %c0_5 = arith.constant 0 : index
    %c0_6 = arith.constant 0 : index
    %7 = vector.load %arg5[%c0_5, %c0_6] : memref<6x128xf32, #tpu.memory_space<vmem>>, vector<6x128xf32>
    tpu.vector_store %arg5[%c0_5, %c0_6], %6 {strides = array<i32>} : memref<6x128xf32, #tpu.memory_space<vmem>>, vector<6x128xf32>,
    return
  }
  func.func @transform_0(%arg0: i32, %arg1: i32) -> (i32, i32) {
    %c0_i32 = arith.constant 0 : i32
    %c0_i32_0 = arith.constant 0 : i32
    %c0_i32_1 = arith.constant 0 : i32
    return %c0_i32, %c0_i32_0 : i32, i32
  }
  func.func @transform_1(%arg0: i32, %arg1: i32) -> (i32, i32) {
    %c0_i32 = arith.constant 0 : i32
    %c0_i32_0 = arith.constant 0 : i32
    %c0_i32_1 = arith.constant 0 : i32
    return %c0_i32, %c0_i32_0 : i32, i32
  }
  func.func @transform_2(%arg0: i32, %arg1: i32) -> (i32, i32) {
    %c0_i32 = arith.constant 0 : i32
    return %arg0, %arg1 : i32, i32
  }
  func.func @transform_3(%arg0: i32, %arg1: i32) -> (i32, i32) {
    %c0_i32 = arith.constant 0 : i32
    return %arg0, %arg1 : i32, i32
  }
}

</mosaic_0001>

<llo_original>
// kernel: tpu_custom_call.1
$region0: #{tpu_custom_call.1}
  #allocation0 [shape = 'u32[]', space=smem, size = 0x4, offset = 0x4, fixed_abs, tag = 'smem constant byte address 0x4 - core index']
  #allocation1 [shape = 'u32[72,128]{1,0:T(1,128)}', space=vmem, size = 0x9000, scoped, tag = 'internal scratch']
  %s0 = inlined_call_operand.vmem [shape: f32[6,1], index: 0, kind: input, shape index: {}]
  %s1 = inlined_call_operand.vmem [shape: f32[6,1], index: 1, kind: input, shape index: {}]
  %s2 = inlined_call_operand.vmem [shape: f32[6,256], index: 2, kind: input, shape index: {}]
  %s3 = inlined_call_operand.hbm [shape: f32[6,256], index: 3, kind: output, shape index: {}]
  %s4 = sld [smem:[#allocation0]]
  $region45: #{tpu_custom_call.1} parent=0
    _
  %s6 = ssub.s32 1, %s4
  %s7 = scalar_select 0, %s6, %s4
  $region1: #{tpu_custom_call.1} parent=0
    #allocation2 [shape = 'u8[8192]{0}', space=vmem, size = 0x2000, scoped, tag = 'output window, operand 0']
    #allocation3 [shape = 's32[2]{0}', space=sflag, size = 0x8, scoped, tag = 'scoped memory for tpu_custom_call.1']
    %8 = vsyncpa [#allocation3], 0
    %s9 = scalar_lea.sflag [#allocation3], 1
    %10 = vsyncpa %s9, 0
    loop: start=0, step=1, limit=4
    $region2: #{tpu_custom_call.1} parent=1 // loop_pre_header
      _
    $region3: #{tpu_custom_call.1} parent=1 // loop_header
      %s12 = sphi 0, %s16
      %p13 = scmp.ge.s32.totalorder %s12, 4
      %s19 = sphi 0, %s31
      %s20 = sphi 0, %s27
      %s21 = sphi 0, %s19
      %s22 = sphi 0, %s20
      %s23 = sphi 0, %s21
      %s24 = sphi 0, %s22
      %s32 = sphi 0, %s32
      %s34 = sphi 0, %s32
      %s35 = sphi 0, %s34
      %s49 = sphi 0, %s35
      %s53 = sphi 0, %s53
      %s55 = sphi 0, %s53
      %s56 = sphi 0, %s55
      %s70 = sphi 0, %s56
      %s78 = sphi 0, %s80
      %s81 = sphi 0, %s78
      %s82 = sphi 0, %s81
      %s98 = sphi 0, %s82
      %s106 = sphi 0, %s108
      %s109 = sphi 0, %s106
      %s110 = sphi 0, %s109
      %s126 = sphi 0, %s110
    $region4: #{tpu_custom_call.1} parent=1 // loop_header_branch
      %15 = sbr.rel (%p13) target = $region8
    $region5: #{tpu_custom_call.1} parent=1 // loop_body
      %s17 = ssub.s32 %s12, 1
      %s18 = ssub.s32 %s12, 2
      %s25 = sadd.s32 1, %s20
      %p26 = scmp.ge.s32.totalorder %s25, 2
      %s27 = scalar_select %p26, 0, %s25
      %s28 = sadd.s32 1, %s19
      %s29 = scalar_select %p26, %s28, %s19
      %p30 = scmp.ge.s32.totalorder %s29, 1
      %s31 = scalar_select %p30, 0, %s29
      %s33 = sadd.s32 %s32, 1
      %p36 = scmp.eq.s32.totalorder %s12, 1
      %p37 = scmp.ne.s32.totalorder %s32, %s34
      %p38 = scmp.eq.s32.totalorder %s12, 0
      %p39 = por %p37, %p38
      %p40 = scmp.ne.s32.totalorder %s32, %s34
      %p41 = scmp.eq.s32.totalorder %s17, 1
      %p42 = por %p40, %p41
      %p43 = scmp.ne.s32.totalorder %s34, %s35
      %p44 = scmp.eq.s32.totalorder %s17, 0
      %p45 = por %p43, %p44
      %p46 = scmp.ne.s32.totalorder %s34, %s35
      %p47 = scmp.eq.s32.totalorder %s18, 1
      %p48 = por %p46, %p47
      %p50 = scmp.ne.s32.totalorder %s35, %s49
      %p51 = scmp.eq.s32.totalorder %s18, 0
      %p52 = por %p50, %p51
      %s54 = sadd.s32 %s53, 1
      %p57 = scmp.eq.s32.totalorder %s12, 1
      %p58 = scmp.ne.s32.totalorder %s53, %s55
      %p59 = scmp.eq.s32.totalorder %s12, 0
      %p60 = por %p58, %p59
      %p61 = scmp.ne.s32.totalorder %s53, %s55
      %p62 = scmp.eq.s32.totalorder %s17, 1
      %p63 = por %p61, %p62
      %p64 = scmp.ne.s32.totalorder %s55, %s56
      %p65 = scmp.eq.s32.totalorder %s17, 0
      %p66 = por %p64, %p65
      %p67 = scmp.ne.s32.totalorder %s55, %s56
      %p68 = scmp.eq.s32.totalorder %s18, 1
      %p69 = por %p67, %p68
      %p71 = scmp.ne.s32.totalorder %s56, %s70
      %p72 = scmp.eq.s32.totalorder %s18, 0
      %p73 = por %p71, %p72
      %s74 = ssub.s32 %s19, %s31
      %s75 = ssub.s32 %s20, %s27
      %s76 = sor.u32 %s74, %s75
      %p77 = scmp.eq.s32.totalorder %s76, 0
      %s79 = sadd.s32 %s78, 1
      %s80 = scalar_select %p77, %s78, %s79
      %p83 = pneg %p77
      %p84 = scmp.eq.s32.totalorder %s12, 1
      %p85 = por %p83, %p84
      %p86 = scmp.ne.s32.totalorder %s78, %s81
      %p87 = scmp.eq.s32.totalorder %s12, 0
      %p88 = por %p86, %p87
      %p89 = scmp.ne.s32.totalorder %s78, %s81
      %p90 = scmp.eq.s32.totalorder %s17, 1
      %p91 = por %p89, %p90
      %p92 = scmp.ne.s32.totalorder %s81, %s82
      %p93 = scmp.eq.s32.totalorder %s17, 0
      %p94 = por %p92, %p93
      %p95 = scmp.ne.s32.totalorder %s81, %s82
      %p96 = scmp.eq.s32.totalorder %s18, 1
      %p97 = por %p95, %p96
      %p99 = scmp.ne.s32.totalorder %s82, %s98
      %p100 = scmp.eq.s32.totalorder %s18, 0
      %p101 = por %p99, %p100
      %s102 = ssub.s32 %s19, %s31
      %s103 = ssub.s32 %s20, %s27
      %s104 = sor.u32 %s102, %s103
      %p105 = scmp.eq.s32.totalorder %s104, 0
      %s107 = sadd.s32 %s106, 1
      %s108 = scalar_select %p105, %s106, %s107
      %p111 = pneg %p105
      %p112 = scmp.eq.s32.totalorder %s12, 1
      %p113 = por %p111, %p112
      %p114 = scmp.ne.s32.totalorder %s106, %s109
      %p115 = scmp.eq.s32.totalorder %s12, 0
      %p116 = por %p114, %p115
      %p117 = scmp.ne.s32.totalorder %s106, %s109
      %p118 = scmp.eq.s32.totalorder %s17, 1
      %p119 = por %p117, %p118
      %p120 = scmp.ne.s32.totalorder %s109, %s110
      %p121 = scmp.eq.s32.totalorder %s17, 0
      %p122 = por %p120, %p121
      %p123 = scmp.ne.s32.totalorder %s109, %s110
      %p124 = scmp.eq.s32.totalorder %s18, 1
      %p125 = por %p123, %p124
      %p127 = scmp.ne.s32.totalorder %s110, %s126
      %p128 = scmp.eq.s32.totalorder %s18, 0
      %p129 = por %p127, %p128
      %p130 = scmp.le.s32.totalorder 1, %s12
      %p131 = scmp.lt.s32.totalorder %s12, 3
      %p132 = pnand %p130, %p131
      %p133 = pneg %p132
      // Predicated region
      $region9: #{tpu_custom_call.1} parent=5 // pred_check
        _
      $region10: #{tpu_custom_call.1} parent=5 // pred_check_branch
        %135 = sbr.rel (%p132) target = $region12
      $region11: #{tpu_custom_call.1} parent=5 // pred_region
        %s136 = ssub.s32 %s12, 1
        // Predicated region
        $region13: #{tpu_custom_call.1} parent=11 // pred_check
          %p137 = pneg %p45
        $region14: #{tpu_custom_call.1} parent=11 // pred_check_branch
          %139 = sbr.rel (%p137) target = $region16
        $region15: #{tpu_custom_call.1} parent=11 // pred_region
          _
        $region16: #{tpu_custom_call.1} parent=11 // pred_fallthru
          _
        // Predicated region
        $region17: #{tpu_custom_call.1} parent=11 // pred_check
          %p140 = pneg %p66
        $region18: #{tpu_custom_call.1} parent=11 // pred_check_branch
          %142 = sbr.rel (%p140) target = $region20
        $region19: #{tpu_custom_call.1} parent=11 // pred_region
          _
        $region20: #{tpu_custom_call.1} parent=11 // pred_fallthru
          _
      $region12: #{tpu_custom_call.1} parent=5 // pred_fallthru
        _
      %p143 = scmp.lt.s32.totalorder %s12, 2
      // Predicated region
      $region21: #{tpu_custom_call.1} parent=5 // pred_check
        %p144 = pneg %p143
      $region22: #{tpu_custom_call.1} parent=5 // pred_check_branch
        %146 = sbr.rel (%p144) target = $region24
      $region23: #{tpu_custom_call.1} parent=5 // pred_region
        // Predicated region
        $region25: #{tpu_custom_call.1} parent=23 // pred_check
          %p147 = pneg %p88
        $region26: #{tpu_custom_call.1} parent=23 // pred_check_branch
          %149 = sbr.rel (%p147) target = $region28
        $region27: #{tpu_custom_call.1} parent=23 // pred_region
          %p150 = scmp.lt.s32.totalorder %s19, 0
          %s151 = scalar_select %p150, %s19, 0
          %p152 = scmp.lt.s32.totalorder %s20, 1
          %s153 = scalar_select %p152, %s20, 1
          %s154 = smul.addr %s151, 2
          %s155 = sadd.s32 %s153, %s154
          %s156 = smul.addr %s155, 8
          %s157 = scalar_lea.vmem %s2, %s156
        $region28: #{tpu_custom_call.1} parent=23 // pred_fallthru
          _
      $region24: #{tpu_custom_call.1} parent=5 // pred_fallthru
        _
      %p158 = scmp.le.s32.totalorder 1, %s12
      %p159 = scmp.lt.s32.totalorder %s12, 3
      %p160 = pnand %p158, %p159
      %p161 = pneg %p160
      // Predicated region
      $region29: #{tpu_custom_call.1} parent=5 // pred_check
        _
      $region30: #{tpu_custom_call.1} parent=5 // pred_check_branch
        %163 = sbr.rel (%p160) target = $region32
      $region31: #{tpu_custom_call.1} parent=5 // pred_region
        %s164 = ssub.s32 %s12, 1
        %p165 = pneg %p45
        %p166 = pneg %p42
        %p167 = pneg %p66
        %p168 = pneg %p63
        %p169 = scmp.lt.s32.totalorder %s21, 0
        %s170 = scalar_select %p169, %s21, 0
        %p171 = scmp.lt.s32.totalorder %s22, 1
        %s172 = scalar_select %p171, %s22, 1
        %s173 = smul.addr %s170, 2
        %s174 = sadd.s32 %s172, %s173
        %s175 = smul.addr %s174, 8
        %s176 = scalar_lea.vmem %s2, %s175
        %p177 = pneg %p94
        %p178 = pneg %p91
        %p179 = pneg %p122
        %p180 = pneg %p119
        %s181 = sand.u32 %s109, 1
        %s182 = scalar_lea.sflag [#allocation3], %s181
        %s183 = sand.u32 %s109, 1
        %s184 = smul.addr %s183, 8
        %s185 = scalar_lea.vmem [#allocation2], %s184
        %p186 = scmp.lt.s32.totalorder %s21, 0
        %s187 = scalar_select %p186, %s21, 0
        %p188 = scmp.lt.s32.totalorder %s22, 1
        %s189 = scalar_select %p188, %s22, 1
        %s190 = smul.addr %s187, 2
        %s191 = sadd.s32 %s189, %s190
        %s192 = smul.addr %s191, 8
        %s193 = scalar_lea.vmem %s2, %s192
        %v194 = vld [vmem:[%s0] sm:$0x3f]
        %v195 = vld [vmem:[%s1] sm:$0x3f]
        %v196 = vld [vmem:[%s193] sm:$0x3f]
        %198 = vset.pattern.permute.xlu0 0
        %199 = vperm.xlu0 %198, %v194
        %v200 = vpop.permute.xlu0 %199
        %v202 = vsub.f32 %v196, %v200
        %204 = vset.pattern.permute.xlu0 0
        %205 = vperm.xlu0 %204, %v195
        %v206 = vpop.permute.xlu0 %205
        %v208 = vrcp.pop %v206
        %v209 = vmul.f32 %v206, %v208
        %v210 = vsub.f32 1.0, %v209
        %v211 = vmul.f32 %v208, %v210
        %v212 = vadd.f32 %v208, %v211
        %vm213 = vweird.f32 %v206
        %vm214 = vweird.f32 %v208
        %vm215 = vmor %vm213, %vm214
        %v216 = vsel %vm215, %v208, %v212
        %v217 = vand.u32 2147483647, %v206
        %vm218 = vcmp.eq.f32.partialorder %v217, 8.507059e+37
        %v219 = vand.u32 %v206, 2147483648
        %v220 = vor.u32 1.1754944e-38, %v219
        %v221 = vsel %vm218, %v220, %v216
        %v222 = vmul.f32 %v202, %v221
        %223 = vst [vmem:[%s185] sm:$0x3f] %v222
        %s224 = sand.u32 %s109, 1
        %s225 = scalar_lea.sflag [#allocation3], %s224
        %s226 = sand.u32 %s109, 1
        %s227 = smul.addr %s226, 8
        %s228 = scalar_lea.vmem [#allocation2], %s227
        // Predicated region
        $region33: #{tpu_custom_call.1} parent=31 // pred_check
          %p229 = pneg %p119
        $region34: #{tpu_custom_call.1} parent=31 // pred_check_branch
          %231 = sbr.rel (%p229) target = $region36
        $region35: #{tpu_custom_call.1} parent=31 // pred_region
          %233 = vsyncadd %s225, 0
          %s234 = smul.addr %s21, 2
          %s235 = sadd.s32 %s22, %s234
          %s236 = smul.addr %s235, 8
          %s237 = scalar_lea.hbm %s3, %s236
          %s239 = sshll.u32 %s228, 4
          %s240 = int_to_ptr.vmem [resolvable:$true] %s239
          %s241 = sshll.u32 %s237, 4
          %s242 = int_to_ptr.hbm [resolvable:$true] %s241
          %244 = dma.vmem_to_hbm [thread:$0]  %s240, 128, %s242, %s225
        $region36: #{tpu_custom_call.1} parent=31 // pred_fallthru
          _
      $region32: #{tpu_custom_call.1} parent=5 // pred_fallthru
        _
      %p245 = scmp.le.s32.totalorder 2, %s12
      // Predicated region
      $region37: #{tpu_custom_call.1} parent=5 // pred_check
        %p246 = pneg %p245
      $region38: #{tpu_custom_call.1} parent=5 // pred_check_branch
        %248 = sbr.rel (%p246) target = $region40
      $region39: #{tpu_custom_call.1} parent=5 // pred_region
        %s249 = ssub.s32 %s12, 2
        // Predicated region
        $region41: #{tpu_custom_call.1} parent=39 // pred_check
          %p250 = pneg %p125
        $region42: #{tpu_custom_call.1} parent=39 // pred_check_branch
          %252 = sbr.rel (%p250) target = $region44
        $region43: #{tpu_custom_call.1} parent=39 // pred_region
          %s253 = sand.u32 %s110, 1
          %s254 = scalar_lea.sflag [#allocation3], %s253
          %s255 = sand.u32 %s110, 1
          %s256 = smul.addr %s255, 8
          %s257 = scalar_lea.vmem [#allocation2], %s256
          %259 = dma.done %s254, 128
        $region44: #{tpu_custom_call.1} parent=39 // pred_fallthru
          _
      $region40: #{tpu_custom_call.1} parent=5 // pred_fallthru
        _
    $region6: #{tpu_custom_call.1} parent=1 // loop_footer
      %s16 = sadd.s32 1, %s12
    $region7: #{tpu_custom_call.1} parent=1 // loop_footer_branch
      %11 = sbr.rel target = $region3
    $region8: #{tpu_custom_call.1} parent=1 // loop_exit
      _
    %260 = vsyncpa [#allocation3], 1
    %s261 = scalar_lea.sflag [#allocation3], 1
    %262 = vsyncpa %s261, 1

</llo_original>
